<compile_context>
chip_gen: v7x
topology: tpu7x:2x2x1
jax: 0.10.0
libtpu: 0.0.40
codegen_flags: <defaults>
</compile_context>

<pallas_src>
import functools

import jax
import jax.numpy as jnp
from jax.experimental import pallas as pl
from jax.experimental.pallas import tpu as pltpu


def _pick_tile(n, target, align):
    """Tile size <= target, multiple of `align`, preferring divisors of n.

    If n <= target the full dim is used (a block equal to the full dim is
    always legal).  If no aligned divisor exists, returns the aligned target
    and the caller pads n up to a multiple of it.
    """
    if n <= target:
        return n
    best = max((target // align) * align, align)
    t = best
    while t >= align:
        if n % t == 0:
            return t
        t -= align
    return best


def _causal_conv1d_kernel(x_ref, w_ref, o_ref, *scratch, K, COt):
    # x_ref:   (1, C_in_p, TT)          current time tile (NCL: time on lanes)
    # w_ref:   (C_out_p, K * C_in_p)    folded weight, fully VMEM-resident
    # o_ref:   (1, COt, TT)             output tile (NCL)
    # scratch (only when K > 1):
    #   rhs_ref:  (K * C_in_p, TT)      im2col of the current time tile
    #   tail_ref: (C_in_p, K - 1)       last K-1 time steps of the previous tile
    t = pl.program_id(1)
    co = pl.program_id(2)
    TT = x_ref.shape[2]

    if K > 1:
        rhs_ref, tail_ref = scratch

        @pl.when((co == 0) & (t == 0))
        def _zero_tail():
            # Causal left padding: the first time tile of each batch sees zeros.
            tail_ref[...] = jnp.zeros_like(tail_ref)

        @pl.when(co == 0)
        def _build_im2col():
            # Build the shifted-window rhs once per (batch, time tile); every
            # C_out tile of this time tile reuses it from VMEM.
            x_tile = x_ref[0]                                      # (C_in_p, TT)
            window = jnp.concatenate([tail_ref[...], x_tile], axis=1)
            rhs_ref[...] = jnp.concatenate(
                [window[:, k:k + TT] for k in range(K)], axis=0)   # (K*C_in_p, TT)
            # Carry the halo for the next time tile (also correct for TT < K-1).
            tail_ref[...] = window[:, TT:]

        rhs = rhs_ref[...]
    else:
        rhs = x_ref[0]                                             # (C_in_p, TT)

    if w_ref.shape[0] == COt:          # single C_out tile: use the whole weight
        w_tile = w_ref[...]
    else:
        off = pl.multiple_of(co * COt, COt)
        w_tile = w_ref[pl.ds(off, COt), :]                         # (COt, K*C_in_p)

    y = jnp.dot(w_tile, rhs, preferred_element_type=jnp.float32)   # (COt, TT)
    o_ref[0] = y.astype(o_ref.dtype)


def causal_conv1d(x, weight, *, time_tile=1024, cout_tile=256, compute_dtype=None):
    """Causal 1D convolution, no bias.

    x:      [B, C_in, T]   (NCL, same layout as PyTorch)
    weight: [C_out, C_in, K]
    returns [B, C_out, T]
    """
    B, C_in, T = x.shape
    C_out, C_in_w, K = weight.shape
    assert C_in == C_in_w, (C_in, C_in_w)

    cd = jnp.dtype(compute_dtype) if compute_dtype is not None else jnp.dtype(x.dtype)
    out_dtype = x.dtype

    # Sublane packing units: 8 for 32-bit, 16 for 16-bit, 32 for 8-bit dtypes.
    cin_align = max(8, 32 // cd.itemsize)
    cout_align = max(8, 32 // jnp.dtype(out_dtype).itemsize)

    # Pad C_in so the axis-0 concat of the K shifted blocks (and the MXU
    # contraction) is sublane-aligned; zero channels contribute nothing.
    C_in_p = -(-C_in // cin_align) * cin_align

    # Keep per-step VMEM (x block, K*C_in im2col, output block) modest; shrink
    # the time tile if C_in is large.
    tt_target = time_tile
    while tt_target > 256 and (K + 4) * C_in_p * tt_target * cd.itemsize > 8 * 1024 * 1024:
        tt_target //= 2

    # Time tile sits on the lane axis -> multiple of 128 (or the full T).
    TT = _pick_tile(T, tt_target, 128)
    T_pad = -(-T // TT) * TT
    # C_out tile sits on the output sublane axis.
    COt = _pick_tile(C_out, cout_tile, cout_align)
    C_out_pad = -(-C_out // COt) * COt

    # Fold taps into the contraction dim: w_f[o, k*C_in_p + c] = weight[o, c, k].
    wp = weight.astype(cd)
    if C_out_pad != C_out or C_in_p != C_in:
        wp = jnp.pad(wp, ((0, C_out_pad - C_out), (0, C_in_p - C_in), (0, 0)))
    w_f = jnp.transpose(wp, (0, 2, 1)).reshape(C_out_pad, K * C_in_p)

    xc = x.astype(cd)
    if C_in_p != C_in or T_pad != T:
        # Right-pad time with zeros (causal -> never feeds real outputs).
        xc = jnp.pad(xc, ((0, 0), (0, C_in_p - C_in), (0, T_pad - T)))

    grid = (B, T_pad // TT, C_out_pad // COt)

    scratch = []
    if K > 1:
        scratch = [
            pltpu.VMEM((K * C_in_p, TT), cd),     # im2col rhs, reused across co
            pltpu.VMEM((C_in_p, K - 1), cd),      # halo tail across time tiles
        ]

    # Per the co-innermost grid: x, w and the output are each streamed once.
    cost = pl.CostEstimate(
        flops=2 * B * C_out * C_in * K * T,
        transcendentals=0,
        bytes_accessed=int(xc.size) * cd.itemsize
        + int(w_f.size) * cd.itemsize
        + B * C_out_pad * T_pad * jnp.dtype(out_dtype).itemsize,
    )

    out = pl.pallas_call(
        functools.partial(_causal_conv1d_kernel, K=K, COt=COt),
        out_shape=jax.ShapeDtypeStruct((B, C_out_pad, T_pad), out_dtype),
        grid_spec=pltpu.PrefetchScalarGridSpec(
            num_scalar_prefetch=0,
            grid=grid,
            in_specs=[
                # x block does not depend on the (innermost) C_out index ->
                # fetched once per (batch, time tile).
                pl.BlockSpec((1, C_in_p, TT), lambda b, t, co: (b, 0, t)),
                # Folded weight fully resident in VMEM: constant block index.
                pl.BlockSpec((C_out_pad, K * C_in_p), lambda b, t, co: (0, 0)),
            ],
            out_specs=pl.BlockSpec((1, COt, TT), lambda b, t, co: (b, co, t)),
            scratch_shapes=scratch,
        ),
        compiler_params=pltpu.CompilerParams(
            # Batch is independent (megacore shardable).  Time carries the halo
            # tail and C_out reuses the per-time-tile im2col scratch, so both
            # stay sequential ("arbitrary").
            dimension_semantics=("parallel", "arbitrary", "arbitrary"),
            vmem_limit_bytes=48 * 1024 * 1024,
        ),
        cost_estimate=cost,
    )(xc, w_f)

    if C_out_pad != C_out or T_pad != T:
        out = out[:, :C_out, :T]
    return out


def _reference(x, weight):
    K = weight.shape[2]
    x_pad = jnp.pad(x, ((0, 0), (0, 0), (K - 1, 0)))
    return jax.lax.conv_general_dilated(
        x_pad, weight, window_strides=(1,), padding="VALID",
        dimension_numbers=("NCH", "OIH", "NCH"),
    )


if __name__ == "__main__":
    key = jax.random.PRNGKey(0)

    # --- Small shapes matching the PyTorch module --------------------------
    B, C_in, C_out, T, K = 2, 4, 8, 16, 3
    kx, kw, key = jax.random.split(key, 3)
    x = jax.random.normal(kx, (B, C_in, T), dtype=jnp.float32)
    bound = 1.0 / (C_in * K) ** 0.5
    weight = jax.random.uniform(kw, (C_out, C_in, K), dtype=jnp.float32,
                                minval=-bound, maxval=bound)

    y = jax.block_until_ready(causal_conv1d(x, weight))
    y_ref = _reference(x, weight)
    assert y.shape == (B, C_out, T)
    assert jnp.allclose(y, y_ref, atol=1e-4, rtol=1e-4)

    # --- Exercise time + C_out tiling (halo carry, resident-weight slice) --
    B2, C2i, C2o, T2, K2 = 1, 4, 16, 256, 3
    kx2, kw2 = jax.random.split(key)
    x2 = jax.random.normal(kx2, (B2, C2i, T2), dtype=jnp.float32)
    w2 = jax.random.uniform(kw2, (C2o, C2i, K2), dtype=jnp.float32,
                            minval=-0.3, maxval=0.3)
    y2 = jax.block_until_ready(causal_conv1d(x2, w2, time_tile=128, cout_tile=8))
    y2_ref = _reference(x2, w2)
    assert y2.shape == (B2, C2o, T2)
    assert jnp.allclose(y2, y2_ref, atol=1e-4, rtol=1e-4)

    print("KERNEL_OK")
</pallas_src>

<mosaic_0001>
module attributes {stable_mosaic.version = 11 : i64} {
  func.func @_causal_conv1d_kernel(%arg0: i32, %arg1: i32, %arg2: i32, %arg3: memref<1x8x16xf32, #tpu.memory_space<vmem>>, %arg4: memref<8x24xf32, #tpu.memory_space<vmem>>, %arg5: memref<1x8x16xf32, #tpu.memory_space<vmem>>, %arg6: memref<24x16xf32, #tpu.memory_space<vmem>>, %arg7: memref<8x2xf32, #tpu.memory_space<vmem>>) attributes {dimension_semantics = [#tpu.dimension_semantics<parallel>, #tpu.dimension_semantics<arbitrary>, #tpu.dimension_semantics<arbitrary>], iteration_bounds = array<i64: 2, 1, 1>, scalar_prefetch = 0 : i64, scratch_operands = 2 : i64, tpu.core_type = #tpu.core_type<tc>, window_params = [{transform_indices = @transform_0, window_bounds = array<i64: 1, 8, 16>}, {pipeline_mode = #tpu.pipeline_mode<synchronous>, transform_indices = @transform_1, window_bounds = array<i64: 8, 24>}, {transform_indices = @transform_2, window_bounds = array<i64: 1, 8, 16>}]} {
    %c0_i32 = arith.constant 0 : i32
    %0 = arith.cmpi eq, %arg2, %c0_i32 : i32
    %c0_i32_0 = arith.constant 0 : i32
    %1 = arith.cmpi eq, %arg1, %c0_i32_0 : i32
    %2 = arith.andi %0, %1 : i1
    %3 = arith.extui %2 : i1 to i32
    %c0_i32_1 = arith.constant 0 : i32
    %4 = arith.cmpi ne, %3, %c0_i32_1 : i32
    scf.if %4 {
      %cst_10 = arith.constant 0.000000e+00 : f32
      %14 = vector.broadcast %cst_10 : f32 to vector<8x2xf32>
      %c0_11 = arith.constant 0 : index
      %c0_12 = arith.constant 0 : index
      %15 = vector.load %arg7[%c0_11, %c0_12] : memref<8x2xf32, #tpu.memory_space<vmem>>, vector<8x2xf32>
      tpu.vector_store %arg7[%c0_11, %c0_12], %14 {strides = array<i32>} : memref<8x2xf32, #tpu.memory_space<vmem>>, vector<8x2xf32>,
    } else {
    }
    %c0_i32_2 = arith.constant 0 : i32
    %5 = arith.cmpi eq, %arg2, %c0_i32_2 : i32
    %6 = arith.extui %5 : i1 to i32
    %c0_i32_3 = arith.constant 0 : i32
    %7 = arith.cmpi ne, %6, %c0_i32_3 : i32
    scf.if %7 {
      %c0_10 = arith.constant 0 : index
      %c0_11 = arith.constant 0 : index
      %c0_12 = arith.constant 0 : index
      %14 = vector.load %arg3[%c0_10, %c0_11, %c0_12] : memref<1x8x16xf32, #tpu.memory_space<vmem>>, vector<1x8x16xf32>
      %15 = vector.shape_cast %14 : vector<1x8x16xf32> to vector<8x16xf32>
      %c0_13 = arith.constant 0 : index
      %c0_14 = arith.constant 0 : index
      %16 = vector.load %arg7[%c0_13, %c0_14] : memref<8x2xf32, #tpu.memory_space<vmem>>, vector<8x2xf32>
      %17 = tpu.concatenate %16, %15 in 1 : vector<8x2xf32>, vector<8x16xf32> -> vector<8x18xf32>
      %18 = vector.extract_strided_slice %17 {offsets = [0, 0], sizes = [8, 16], strides = [1, 1]} : vector<8x18xf32> to vector<8x16xf32>
      %19 = vector.extract_strided_slice %17 {offsets = [0, 1], sizes = [8, 16], strides = [1, 1]} : vector<8x18xf32> to vector<8x16xf32>
      %20 = vector.extract_strided_slice %17 {offsets = [0, 2], sizes = [8, 16], strides = [1, 1]} : vector<8x18xf32> to vector<8x16xf32>
      %21 = tpu.concatenate %18, %19, %20 in 0 : vector<8x16xf32>, vector<8x16xf32>, vector<8x16xf32> -> vector<24x16xf32>
      %c0_15 = arith.constant 0 : index
      %c0_16 = arith.constant 0 : index
      %22 = vector.load %arg6[%c0_15, %c0_16] : memref<24x16xf32, #tpu.memory_space<vmem>>, vector<24x16xf32>
      tpu.vector_store %arg6[%c0_15, %c0_16], %21 {strides = array<i32>} : memref<24x16xf32, #tpu.memory_space<vmem>>, vector<24x16xf32>,
      %23 = vector.extract_strided_slice %17 {offsets = [0, 16], sizes = [8, 2], strides = [1, 1]} : vector<8x18xf32> to vector<8x2xf32>
      %c0_17 = arith.constant 0 : index
      %c0_18 = arith.constant 0 : index
      %24 = vector.load %arg7[%c0_17, %c0_18] : memref<8x2xf32, #tpu.memory_space<vmem>>, vector<8x2xf32>
      tpu.vector_store %arg7[%c0_17, %c0_18], %23 {strides = array<i32>} : memref<8x2xf32, #tpu.memory_space<vmem>>, vector<8x2xf32>,
    } else {
    }
    %c0 = arith.constant 0 : index
    %c0_4 = arith.constant 0 : index
    %8 = vector.load %arg6[%c0, %c0_4] : memref<24x16xf32, #tpu.memory_space<vmem>>, vector<24x16xf32>
    %c0_5 = arith.constant 0 : index
    %c0_6 = arith.constant 0 : index
    %9 = vector.load %arg4[%c0_5, %c0_6] : memref<8x24xf32, #tpu.memory_space<vmem>>, vector<8x24xf32>
    %cst = arith.constant dense<0.000000e+00> : vector<8x16xf32>
    %10 = tpu.matmul %9, %8, %cst {dimension_numbers = #tpu.dot_dimension_numbers<[1], [0], [0], [1], [0, 0, 1, 1], [], []>} : vector<8x24xf32>, vector<24x16xf32>, vector<8x16xf32> -> vector<8x16xf32>
    %c0_7 = arith.constant 0 : index
    %c0_8 = arith.constant 0 : index
    %c0_9 = arith.constant 0 : index
    %11 = vector.load %arg5[%c0_7, %c0_8, %c0_9] : memref<1x8x16xf32, #tpu.memory_space<vmem>>, vector<1x8x16xf32>
    %12 = vector.shape_cast %11 : vector<1x8x16xf32> to vector<8x16xf32>
    %13 = vector.shape_cast %10 : vector<8x16xf32> to vector<1x8x16xf32>
    tpu.vector_store %arg5[%c0_7, %c0_8, %c0_9], %13 {strides = array<i32>} : memref<1x8x16xf32, #tpu.memory_space<vmem>>, vector<1x8x16xf32>,
    return
  }
  func.func @transform_0(%arg0: i32, %arg1: i32, %arg2: i32) -> (i32, i32, i32) {
    %c0_i32 = arith.constant 0 : i32
    %c0_i32_0 = arith.constant 0 : i32
    return %arg0, %c0_i32, %arg1 : i32, i32, i32
  }
  func.func @transform_1(%arg0: i32, %arg1: i32, %arg2: i32) -> (i32, i32) {
    %c0_i32 = arith.constant 0 : i32
    %c0_i32_0 = arith.constant 0 : i32
    %c0_i32_1 = arith.constant 0 : i32
    return %c0_i32, %c0_i32_0 : i32, i32
  }
  func.func @transform_2(%arg0: i32, %arg1: i32, %arg2: i32) -> (i32, i32, i32) {
    %c0_i32 = arith.constant 0 : i32
    return %arg0, %arg2, %arg1 : i32, i32, i32
  }
}

</mosaic_0001>

<llo_original>
// kernel: tpu_custom_call.1
$region0: #{tpu_custom_call.1}
  #allocation0 [shape = 'u32[]', space=smem, size = 0x4, offset = 0x4, fixed_abs, tag = 'smem constant byte address 0x4 - core index']
  #allocation1 [shape = 'u32[144,128]{1,0:T(1,128)}', space=vmem, size = 0x12000, scoped, tag = 'internal scratch']
  #allocation2 [shape = 'f32[24,16]{1,0:T(8,128)}', space=vmem, size = 0x3000, scoped, tag = 'scratch operand']
  #allocation3 [shape = 'f32[8,2]{1,0:T(8,128)}', space=vmem, size = 0x1000, scoped, tag = 'scratch operand']
  %s0 = inlined_call_operand.hbm [shape: f32[2,8,16], index: 0, kind: input, shape index: {}]
  %s1 = inlined_call_operand.hbm [shape: f32[8,24], index: 1, kind: input, shape index: {}]
  %s2 = inlined_call_operand.hbm [shape: f32[2,8,16], index: 2, kind: output, shape index: {}]
  %s3 = sld [smem:[#allocation0]]
  $region57: #{tpu_custom_call.1} parent=0
    _
  %s5 = ssub.s32 1, %s3
  %s6 = scalar_select 0, %s5, %s3
  $region1: #{tpu_custom_call.1} parent=0
    #allocation4 [shape = 'u8[8192]{0}', space=vmem, size = 0x2000, scoped, tag = 'input window, operand 0']
    #allocation5 [shape = 's32[2]{0}', space=sflag, size = 0x8, scoped, tag = 'scoped memory for tpu_custom_call.1']
    #allocation6 [shape = 's32[2]{0}', space=sflag, size = 0x8, scoped, tag = 'scoped memory for tpu_custom_call.1']
    #allocation7 [shape = 'u8[4096]{0}', space=vmem, size = 0x1000, scoped, tag = 'input window, operand 1, single buffered']
    #allocation8 [shape = 's32[1]{0}', space=sflag, size = 0x4, scoped, tag = 'scoped memory for tpu_custom_call.1']
    #allocation9 [shape = 'u8[8192]{0}', space=vmem, size = 0x2000, scoped, tag = 'output window, operand 0']
    %7 = vsyncpa [#allocation5], 0
    %s8 = scalar_lea.sflag [#allocation5], 1
    %9 = vsyncpa %s8, 0
    %10 = vsyncpa [#allocation8], 0
    %11 = vsyncpa [#allocation6], 0
    %s12 = scalar_lea.sflag [#allocation6], 1
    %13 = vsyncpa %s12, 0
    loop: start=0, step=1, limit=4
    $region2: #{tpu_custom_call.1} parent=1 // loop_pre_header
      _
    $region3: #{tpu_custom_call.1} parent=1 // loop_header
      %s15 = sphi 0, %s19
      %p16 = scmp.ge.s32.totalorder %s15, 4
      %s22 = sphi 0, %s41
      %s23 = sphi 0, %s37
      %s24 = sphi 0, %s33
      %s25 = sphi 0, %s22
      %s26 = sphi 0, %s23
      %s27 = sphi 0, %s24
      %s28 = sphi 0, %s25
      %s29 = sphi 0, %s26
      %s30 = sphi 0, %s27
      %s46 = sphi 0, %s48
      %s49 = sphi 0, %s46
      %s50 = sphi 0, %s49
      %s66 = sphi 0, %s50
      %s70 = sphi 0, %s70
      %s72 = sphi 0, %s70
      %s73 = sphi 0, %s72
      %s87 = sphi 0, %s73
      %s97 = sphi 0, %s99
      %s100 = sphi 0, %s97
      %s101 = sphi 0, %s100
      %s117 = sphi 0, %s101
    $region4: #{tpu_custom_call.1} parent=1 // loop_header_branch
      %18 = sbr.rel (%p16) target = $region8
    $region5: #{tpu_custom_call.1} parent=1 // loop_body
      %s20 = ssub.s32 %s15, 1
      %s21 = ssub.s32 %s15, 2
      %s31 = sadd.s32 1, %s24
      %p32 = scmp.ge.s32.totalorder %s31, 1
      %s33 = scalar_select %p32, 0, %s31
      %s34 = sadd.s32 1, %s23
      %s35 = scalar_select %p32, %s34, %s23
      %p36 = scmp.ge.s32.totalorder %s35, 1
      %s37 = scalar_select %p36, 0, %s35
      %s38 = sadd.s32 1, %s22
      %s39 = scalar_select %p36, %s38, %s22
      %p40 = scmp.ge.s32.totalorder %s39, 2
      %s41 = scalar_select %p40, 0, %s39
      %s42 = ssub.s32 %s22, %s41
      %s43 = ssub.s32 %s23, %s37
      %s44 = sor.u32 %s42, %s43
      %p45 = scmp.eq.s32.totalorder %s44, 0
      %s47 = sadd.s32 %s46, 1
      %s48 = scalar_select %p45, %s46, %s47
      %p51 = pneg %p45
      %p52 = scmp.eq.s32.totalorder %s15, 1
      %p53 = por %p51, %p52
      %p54 = scmp.ne.s32.totalorder %s46, %s49
      %p55 = scmp.eq.s32.totalorder %s15, 0
      %p56 = por %p54, %p55
      %p57 = scmp.ne.s32.totalorder %s46, %s49
      %p58 = scmp.eq.s32.totalorder %s20, 1
      %p59 = por %p57, %p58
      %p60 = scmp.ne.s32.totalorder %s49, %s50
      %p61 = scmp.eq.s32.totalorder %s20, 0
      %p62 = por %p60, %p61
      %p63 = scmp.ne.s32.totalorder %s49, %s50
      %p64 = scmp.eq.s32.totalorder %s21, 1
      %p65 = por %p63, %p64
      %p67 = scmp.ne.s32.totalorder %s50, %s66
      %p68 = scmp.eq.s32.totalorder %s21, 0
      %p69 = por %p67, %p68
      %s71 = sadd.s32 %s70, 1
      %p74 = scmp.eq.s32.totalorder %s15, 1
      %p75 = scmp.ne.s32.totalorder %s70, %s72
      %p76 = scmp.eq.s32.totalorder %s15, 0
      %p77 = por %p75, %p76
      %p78 = scmp.ne.s32.totalorder %s70, %s72
      %p79 = scmp.eq.s32.totalorder %s20, 1
      %p80 = por %p78, %p79
      %p81 = scmp.ne.s32.totalorder %s72, %s73
      %p82 = scmp.eq.s32.totalorder %s20, 0
      %p83 = por %p81, %p82
      %p84 = scmp.ne.s32.totalorder %s72, %s73
      %p85 = scmp.eq.s32.totalorder %s21, 1
      %p86 = por %p84, %p85
      %p88 = scmp.ne.s32.totalorder %s73, %s87
      %p89 = scmp.eq.s32.totalorder %s21, 0
      %p90 = por %p88, %p89
      %s91 = ssub.s32 %s22, %s41
      %s92 = ssub.s32 %s24, %s33
      %s93 = sor.u32 %s91, %s92
      %s94 = ssub.s32 %s23, %s37
      %s95 = sor.u32 %s93, %s94
      %p96 = scmp.eq.s32.totalorder %s95, 0
      %s98 = sadd.s32 %s97, 1
      %s99 = scalar_select %p96, %s97, %s98
      %p102 = pneg %p96
      %p103 = scmp.eq.s32.totalorder %s15, 1
      %p104 = por %p102, %p103
      %p105 = scmp.ne.s32.totalorder %s97, %s100
      %p106 = scmp.eq.s32.totalorder %s15, 0
      %p107 = por %p105, %p106
      %p108 = scmp.ne.s32.totalorder %s97, %s100
      %p109 = scmp.eq.s32.totalorder %s20, 1
      %p110 = por %p108, %p109
      %p111 = scmp.ne.s32.totalorder %s100, %s101
      %p112 = scmp.eq.s32.totalorder %s20, 0
      %p113 = por %p111, %p112
      %p114 = scmp.ne.s32.totalorder %s100, %s101
      %p115 = scmp.eq.s32.totalorder %s21, 1
      %p116 = por %p114, %p115
      %p118 = scmp.ne.s32.totalorder %s101, %s117
      %p119 = scmp.eq.s32.totalorder %s21, 0
      %p120 = por %p118, %p119
      %p121 = scmp.le.s32.totalorder 1, %s15
      %p122 = scmp.lt.s32.totalorder %s15, 3
      %p123 = pnand %p121, %p122
      %p124 = pneg %p123
      // Predicated region
      $region9: #{tpu_custom_call.1} parent=5 // pred_check
        _
      $region10: #{tpu_custom_call.1} parent=5 // pred_check_branch
        %126 = sbr.rel (%p123) target = $region12
      $region11: #{tpu_custom_call.1} parent=5 // pred_region
        %s127 = ssub.s32 %s15, 1
        // Predicated region
        $region13: #{tpu_custom_call.1} parent=11 // pred_check
          %p128 = pneg %p83
        $region14: #{tpu_custom_call.1} parent=11 // pred_check_branch
          %130 = sbr.rel (%p128) target = $region16
        $region15: #{tpu_custom_call.1} parent=11 // pred_region
          %s132 = ssub.s32 128, 128
          %133 = vsyncadd [#allocation8], %s132
          %s135 = sshll.u32 [#allocation7], 4
          %s136 = int_to_ptr.vmem [resolvable:$true] %s135
          %138 = dma.hbm_to_vmem [thread:$0]  %s1, 128, %s136, [#allocation8]
        $region16: #{tpu_custom_call.1} parent=11 // pred_fallthru
          _
      $region12: #{tpu_custom_call.1} parent=5 // pred_fallthru
        _
      %p139 = scmp.lt.s32.totalorder %s15, 2
      // Predicated region
      $region17: #{tpu_custom_call.1} parent=5 // pred_check
        %p140 = pneg %p139
      $region18: #{tpu_custom_call.1} parent=5 // pred_check_branch
        %142 = sbr.rel (%p140) target = $region20
      $region19: #{tpu_custom_call.1} parent=5 // pred_region
        // Predicated region
        $region21: #{tpu_custom_call.1} parent=19 // pred_check
          %p143 = pneg %p56
        $region22: #{tpu_custom_call.1} parent=19 // pred_check_branch
          %145 = sbr.rel (%p143) target = $region24
        $region23: #{tpu_custom_call.1} parent=19 // pred_region
          %s146 = sand.u32 %s46, 1
          %s147 = scalar_lea.sflag [#allocation5], %s146
          %s148 = sand.u32 %s46, 1
          %s149 = smul.addr %s148, 8
          %s150 = scalar_lea.vmem [#allocation4], %s149
          %s152 = ssub.s32 128, 128
          %153 = vsyncadd %s147, %s152
          %s154 = sadd.s32 %s23, %s22
          %s155 = smul.addr %s154, 128
          %s156 = scalar_lea.hbm %s0, %s155
          %s158 = sshll.u32 %s150, 4
          %s159 = int_to_ptr.vmem [resolvable:$true] %s158
          %161 = dma.hbm_to_vmem [thread:$0]  %s156, 128, %s159, %s147
        $region24: #{tpu_custom_call.1} parent=19 // pred_fallthru
          _
      $region20: #{tpu_custom_call.1} parent=5 // pred_fallthru
        _
      %p162 = scmp.le.s32.totalorder 1, %s15
      %p163 = scmp.lt.s32.totalorder %s15, 3
      %p164 = pnand %p162, %p163
      %p165 = pneg %p164
      // Predicated region
      $region25: #{tpu_custom_call.1} parent=5 // pred_check
        _
      $region26: #{tpu_custom_call.1} parent=5 // pred_check_branch
        %167 = sbr.rel (%p164) target = $region28
      $region27: #{tpu_custom_call.1} parent=5 // pred_region
        %s168 = ssub.s32 %s15, 1
        %s169 = sand.u32 %s49, 1
        %s170 = scalar_lea.sflag [#allocation5], %s169
        %s171 = sand.u32 %s49, 1
        %s172 = smul.addr %s171, 8
        %s173 = scalar_lea.vmem [#allocation4], %s172
        // Predicated region
        $region29: #{tpu_custom_call.1} parent=27 // pred_check
          %p174 = pneg %p62
        $region30: #{tpu_custom_call.1} parent=27 // pred_check_branch
          %176 = sbr.rel (%p174) target = $region32
        $region31: #{tpu_custom_call.1} parent=27 // pred_region
          %177 = dma.done %s170, 128
        $region32: #{tpu_custom_call.1} parent=27 // pred_fallthru
          _
        // Predicated region
        $region33: #{tpu_custom_call.1} parent=27 // pred_check
          %p178 = pneg %p83
        $region34: #{tpu_custom_call.1} parent=27 // pred_check_branch
          %180 = sbr.rel (%p178) target = $region36
        $region35: #{tpu_custom_call.1} parent=27 // pred_region
          %181 = dma.done [#allocation8], 128
        $region36: #{tpu_custom_call.1} parent=27 // pred_fallthru
          _
        %s182 = sand.u32 %s49, 1
        %s183 = scalar_lea.sflag [#allocation5], %s182
        %s184 = sand.u32 %s49, 1
        %s185 = smul.addr %s184, 8
        %s186 = scalar_lea.vmem [#allocation4], %s185
        %p187 = pneg %p62
        %p188 = pneg %p59
        %p189 = pneg %p83
        %p190 = pneg %p80
        %p191 = pneg %p113
        %p192 = pneg %p110
        %s193 = sand.u32 %s100, 1
        %s194 = scalar_lea.sflag [#allocation6], %s193
        %s195 = sand.u32 %s100, 1
        %s196 = smul.addr %s195, 8
        %s197 = scalar_lea.vmem [#allocation9], %s196
        %p198 = scmp.eq.s32.totalorder %s27, 0
        %p199 = scmp.eq.s32.totalorder %s26, 0
        %p200 = pnand %p198, %p199
        %p201 = pneg %p200
        // Predicated region
        $region37: #{tpu_custom_call.1} parent=27 // pred_check
          _
        $region38: #{tpu_custom_call.1} parent=27 // pred_check_branch
          %203 = sbr.rel (%p200) target = $region40
        $region39: #{tpu_custom_call.1} parent=27 // pred_region
          %vm204 = vcmask 15360
          %205 = vst.msk [vmem:[#allocation3] sm:$0xff] %vm204, 0.0
        $region40: #{tpu_custom_call.1} parent=27 // pred_fallthru
          _
        // Predicated region
        $region41: #{tpu_custom_call.1} parent=27 // pred_check
          %p206 = pneg %p198
        $region42: #{tpu_custom_call.1} parent=27 // pred_check_branch
          %208 = sbr.rel (%p206) target = $region44
        $region43: #{tpu_custom_call.1} parent=27 // pred_region
          %v209 = vld [vmem:[%s173] sm:$0xff]
          %v210 = vld [vmem:[#allocation3] sm:$0xff]
          %212 = vrot.lane.b32.xlu0 %v209, 2
          %v213 = vpop.permute.xlu0 %212
          %vm215 = vcmask 15360
          %v216 = vsel %vm215, %v210, %v213
          %218 = vrot.lane.b32.xlu0 %v216, 127
          %v219 = vpop.permute.xlu0 %218
          %221 = vrot.lane.b32.xlu0 %v216, 126
          %v222 = vpop.permute.xlu0 %221
          %vm224 = vcmask 130048
          %225 = vst.msk [vmem:[#allocation2] sm:$0xff] %vm224, %v216
          %226 = vst.msk [vmem:[#allocation2 + $0x8] sm:$0xff] %vm224, %v219
          %227 = vst.msk [vmem:[#allocation2 + $0x10] sm:$0xff] %vm224, %v222
          %228 = vrot.lane.b32.xlu0 %v216, 112
          %v229 = vpop.permute.xlu0 %228
          %231 = vst.msk [vmem:[#allocation3] sm:$0xff] %vm215, %v229
        $region44: #{tpu_custom_call.1} parent=27 // pred_fallthru
          _
        %v232 = vld [vmem:[#allocation2] sm:$0xff]
        %v233 = vld [vmem:[#allocation2 + $0x8] sm:$0xff]
        %v234 = vld [vmem:[#allocation2 + $0x10] sm:$0xff]
        %v235 = vld [vmem:[#allocation7] sm:$0xff]
        %vm236 = vcmask 195584
        %v238 = vsel %vm236, %v235, 0
        %240 = vmatprep.subr.mxu0 0.0
        %241 = vmatpush1.msra.mxu0 %v232
        %242 = vmatprep.subr.mxu0 0.0
        %243 = vmatpush1.msra.mxu0 %v233
        %244 = vmatprep.subr.mxu0 0.0
        %245 = vmatpush1.msra.mxu0 %v234
        %246 = vmatprep.subr.mxu0 0.0
        %247 = vmatpush1.msra.mxu0 0.0
        %248 = vmatprep.subr.mxu0 0.0
        %249 = vmatpush1.msra.mxu0 0.0
        %250 = vmatprep.subr.mxu0 0.0
        %251 = vmatpush1.msra.mxu0 0.0
        %252 = vmatprep.subr.mxu0 0.0
        %253 = vmatpush1.msra.mxu0 0.0
        %254 = vmatprep.subr.mxu0 0.0
        %255 = vmatpush1.msra.mxu0 0.0
        %256 = vmatprep.subr.mxu0 0.0
        %257 = vmatpush1.msra.mxu0 0.0
        %258 = vmatprep.subr.mxu0 0.0
        %259 = vmatpush1.msra.mxu0 0.0
        %260 = vmatprep.subr.mxu0 0.0
        %261 = vmatpush1.msra.mxu0 0.0
        %262 = vmatprep.subr.mxu0 0.0
        %263 = vmatpush1.msra.mxu0 0.0
        %264 = vmatprep.subr.mxu0 0.0
        %265 = vmatpush1.msra.mxu0 0.0
        %266 = vmatprep.subr.mxu0 0.0
        %267 = vmatpush1.msra.mxu0 0.0
        %268 = vmatprep.subr.mxu0 0.0
        %269 = vmatpush1.msra.mxu0 0.0
        %270 = vmatprep.subr.mxu0 0.0
        %271 = vmatpush1.msra.mxu0 0.0
        %272 = vmatprep.subr.mxu0 0.0
        %273 = vmatpush1.msra.mxu0 0.0
        %274 = vmatprep.subr.mxu0 0.0
        %275 = vmatpush1.msra.mxu0 0.0
        %276 = vmatprep.subr.mxu0 0.0
        %277 = vmatpush1.msra.mxu0 0.0
        %278 = vmatprep.subr.mxu0 0.0
        %279 = vmatpush1.msra.mxu0 0.0
        %280 = vmatprep.subr.mxu0 0.0
        %281 = vmatpush1.msra.mxu0 0.0
        %282 = vmatprep.subr.mxu0 0.0
        %283 = vmatpush1.msra.mxu0 0.0
        %284 = vmatprep.subr.mxu0 0.0
        %285 = vmatpush1.msra.mxu0 0.0
        %286 = vmatprep.subr.mxu0 0.0
        %287 = vmatpush1.msra.mxu0 0.0
        %288 = vmatprep.subr.mxu0 0.0
        %289 = vmatpush1.msra.mxu0 0.0
        %290 = vmatprep.subr.mxu0 0.0
        %291 = vmatpush1.msra.mxu0 0.0
        %292 = vmatprep.subr.mxu0 0.0
        %293 = vmatpush1.msra.mxu0 0.0
        %294 = vmatprep.subr.mxu0 0.0
        %295 = vmatpush1.msra.mxu0 0.0
        %296 = vmatprep.subr.mxu0 0.0
        %297 = vmatpush1.msra.mxu0 0.0
        %298 = vmatprep.subr.mxu0 0.0
        %299 = vmatpush1.msra.mxu0 0.0
        %300 = vmatprep.subr.mxu0 0.0
        %301 = vmatpush1.msra.mxu0 0.0
        %302 = vmatprep.subr.mxu0 0.0
        %303 = vmatpush1.msra.mxu0 0.0
        %304 = vmatprep.mubr.f32.mxu0 0.0
        %305 = vmatmul.mubr.f32.gmra.mrb[0].mxu0 %v238
        %v306 = vpop.f32.mrb[0].mxu0
        %v307 = vadd.f32 0.0, %v306
        %v308 = vpop.f32.mrb[0].mxu0
        %309 = vdwg.mxu0
        %vm310 = vcmask 130048
        %311 = vst.msk [vmem:[%s197] sm:$0xff] %vm310, %v307
        %s312 = sand.u32 %s100, 1
        %s313 = scalar_lea.sflag [#allocation6], %s312
        %s314 = sand.u32 %s100, 1
        %s315 = smul.addr %s314, 8
        %s316 = scalar_lea.vmem [#allocation9], %s315
        // Predicated region
        $region45: #{tpu_custom_call.1} parent=27 // pred_check
          %p317 = pneg %p110
        $region46: #{tpu_custom_call.1} parent=27 // pred_check_branch
          %319 = sbr.rel (%p317) target = $region48
        $region47: #{tpu_custom_call.1} parent=27 // pred_region
          %s321 = ssub.s32 128, 128
          %322 = vsyncadd %s313, %s321
          %s323 = sadd.s32 %s26, %s27
          %s324 = sadd.s32 %s323, %s25
          %s325 = smul.addr %s324, 128
          %s326 = scalar_lea.hbm %s2, %s325
          %s328 = sshll.u32 %s316, 4
          %s329 = int_to_ptr.vmem [resolvable:$true] %s328
          %331 = dma.vmem_to_hbm [thread:$0]  %s329, 128, %s326, %s313
        $region48: #{tpu_custom_call.1} parent=27 // pred_fallthru
          _
      $region28: #{tpu_custom_call.1} parent=5 // pred_fallthru
        _
      %p332 = scmp.le.s32.totalorder 2, %s15
      // Predicated region
      $region49: #{tpu_custom_call.1} parent=5 // pred_check
        %p333 = pneg %p332
      $region50: #{tpu_custom_call.1} parent=5 // pred_check_branch
        %335 = sbr.rel (%p333) target = $region52
      $region51: #{tpu_custom_call.1} parent=5 // pred_region
        %s336 = ssub.s32 %s15, 2
        // Predicated region
        $region53: #{tpu_custom_call.1} parent=51 // pred_check
          %p337 = pneg %p116
        $region54: #{tpu_custom_call.1} parent=51 // pred_check_branch
          %339 = sbr.rel (%p337) target = $region56
        $region55: #{tpu_custom_call.1} parent=51 // pred_region
          %s340 = sand.u32 %s101, 1
          %s341 = scalar_lea.sflag [#allocation6], %s340
          %s342 = sand.u32 %s101, 1
          %s343 = smul.addr %s342, 8
          %s344 = scalar_lea.vmem [#allocation9], %s343
          %345 = dma.done %s341, 128
        $region56: #{tpu_custom_call.1} parent=51 // pred_fallthru
          _
      $region52: #{tpu_custom_call.1} parent=5 // pred_fallthru
        _
    $region6: #{tpu_custom_call.1} parent=1 // loop_footer
      %s19 = sadd.s32 1, %s15
    $region7: #{tpu_custom_call.1} parent=1 // loop_footer_branch
      %14 = sbr.rel target = $region3
    $region8: #{tpu_custom_call.1} parent=1 // loop_exit
      _
    %346 = vsyncpa [#allocation5], 1
    %s347 = scalar_lea.sflag [#allocation5], 1
    %348 = vsyncpa %s347, 1
    %349 = vsyncpa [#allocation8], 1
    %350 = vsyncpa [#allocation6], 1
    %s351 = scalar_lea.sflag [#allocation6], 1
    %352 = vsyncpa %s351, 1

</llo_original>
